<compile_context>
chip_gen: v7x
topology: tpu7x:2x2x1
jax: 0.10.0
libtpu: 0.0.40
codegen_flags: <defaults>
</compile_context>

<pallas_src>
import jax
import jax.numpy as jnp
from jax.experimental import pallas as pl
from jax.experimental.pallas import tpu as pltpu

STATE_DIM = 3            # Pendulum obs dim
ACT_DIM = 1              # Pendulum act dim
IN_DIM = STATE_DIM + ACT_DIM   # 4
K_PAD = 8                # input rows: [s0, s1, s2, a, 1(bias), 0, 0, 0]
HID = 256
OUT_DIM = 1
OUT_ROWS = 8             # W3 padded to 8 output rows (sublane-aligned store)


def _round_up(x, m):
    return (x + m - 1) // m * m


def critic_kernel(x_ref, w1_ref, w2_ref, b2_ref, w3_ref, o_ref):
    # x_ref : (K_PAD, TB) bf16   -- batch lane-dense, ones row folds in b1
    # w1_ref: (HID, K_PAD) bf16  -- [W1 | b1 | 0...] (PyTorch (out, in) layout)
    # w2_ref: (HID, HID)  bf16
    # b2_ref: (HID, 1)    f32
    # w3_ref: (OUT_ROWS, HID) f32 (row 0 = real W3, rows 1..7 zero)
    # o_ref : (OUT_ROWS, TB) f32

    # ---- layer 1 (+ fused bias): MXU, bf16 operands, f32 accumulate ----
    h1 = jnp.dot(w1_ref[...], x_ref[...],
                 preferred_element_type=jnp.float32)          # (HID, TB)
    h1 = jnp.maximum(h1, 0.0)

    # ---- layer 2: 256x256 MXU matmul, bf16 operands, f32 accumulate ----
    h2 = jnp.dot(w2_ref[...], h1.astype(jnp.bfloat16),
                 preferred_element_type=jnp.float32)          # (HID, TB)
    h2 = jnp.maximum(h2 + b2_ref[...], 0.0)

    # ---- layer 3: tiny (8,256) LHS kept in f32 for output precision ----
    o_ref[...] = jnp.dot(w3_ref[...], h2,
                         preferred_element_type=jnp.float32)  # (OUT_ROWS, TB)


def critic_forward(state, action, params, *, tile_batch=2048):
    """state: (B, 3) f32, action: (B, 1) f32 -> (B, 1) f32."""
    w1, b1, w2, b2, w3, b3 = params   # PyTorch layout: W (out,in), b (out,)
    B = state.shape[0]

    # ---- batch tile selection ----
    tile_batch = _round_up(tile_batch, 128)
    B128 = _round_up(B, 128)
    TB = min(tile_batch, B128)
    # Prefer >= 2 grid steps when the batch is big enough (v7x megacore).
    if B128 // TB < 2 and B128 >= 256:
        TB = _round_up((B128 + 1) // 2, 128)
    B_pad = _round_up(B, TB)

    # ---- inputs: fused concat, b1 folding (ones row), lane-dense batch ----
    ones = jnp.ones((B, 1), state.dtype)
    x = jnp.concatenate([state, action, ones], axis=1)          # (B, 5)
    x = jnp.pad(x, ((0, B_pad - B), (0, K_PAD - (IN_DIM + 1))))  # (B_pad, 8)
    x_t = x.T.astype(jnp.bfloat16)                               # (8, B_pad)

    # ---- weights (bf16 for the MXU-heavy layers, f32 for layer 3) ----
    w1_aug = jnp.concatenate([w1, b1[:, None]], axis=1)          # (256, 5)
    w1_aug = jnp.pad(
        w1_aug, ((0, 0), (0, K_PAD - (IN_DIM + 1)))).astype(jnp.bfloat16)
    w2_bf = w2.astype(jnp.bfloat16)                              # (256, 256)
    b2_col = b2.reshape(HID, 1)                                  # (256, 1) f32
    w3_pad = jnp.pad(w3, ((0, OUT_ROWS - OUT_DIM), (0, 0)))      # (8, 256) f32

    const = lambda shape: pl.BlockSpec(shape, lambda i: (0, 0))

    flops = 2 * B_pad * (K_PAD * HID + HID * HID + HID * OUT_ROWS)
    bytes_accessed = (2 * K_PAD * B_pad                 # x^T bf16
                      + 4 * OUT_ROWS * B_pad            # out f32
                      + 2 * (K_PAD * HID + HID * HID)   # bf16 weights
                      + 4 * (HID + OUT_ROWS * HID))     # f32 b2, W3

    out_t = pl.pallas_call(
        critic_kernel,
        out_shape=jax.ShapeDtypeStruct((OUT_ROWS, B_pad), jnp.float32),
        grid_spec=pltpu.PrefetchScalarGridSpec(
            num_scalar_prefetch=0,
            grid=(B_pad // TB,),
            in_specs=[
                pl.BlockSpec((K_PAD, TB), lambda i: (0, i)),  # x^T (bf16)
                const((HID, K_PAD)),       # [W1 | b1] (bf16)
                const((HID, HID)),         # W2 (bf16)
                const((HID, 1)),           # b2 (f32)
                const((OUT_ROWS, HID)),    # W3 padded (f32)
            ],
            out_specs=pl.BlockSpec((OUT_ROWS, TB), lambda i: (0, i)),
        ),
        compiler_params=pltpu.CompilerParams(
            dimension_semantics=("parallel",),
            vmem_limit_bytes=40 * 1024 * 1024),
        cost_estimate=pl.CostEstimate(
            flops=flops, transcendentals=0, bytes_accessed=bytes_accessed),
    )(x_t, w1_aug, w2_bf, b2_col, w3_pad)

    # Row 0 of the transposed output is the real Q-value; b3 added here
    # (scalar, cheaper than an in-kernel broadcast add).
    return out_t[0, :B].reshape(B, 1) + b3


def init_params(key):
    """Deterministic init; PyTorch layout: W (out, in), b (out,)."""
    k1, k2, k3, k4, k5, k6 = jax.random.split(key, 6)

    def uniform_fan_in(k, shape, fan_in):
        bound = 1.0 / jnp.sqrt(fan_in)
        return jax.random.uniform(k, shape, jnp.float32, -bound, bound)

    w1 = uniform_fan_in(k1, (HID, IN_DIM), IN_DIM)
    b1 = uniform_fan_in(k2, (HID,), IN_DIM)
    w2 = uniform_fan_in(k3, (HID, HID), HID)
    b2 = uniform_fan_in(k4, (HID,), HID)
    w3 = uniform_fan_in(k5, (OUT_DIM, HID), HID)
    b3 = uniform_fan_in(k6, (OUT_DIM,), HID)
    return (w1, b1, w2, b2, w3, b3)


def critic_ref(state, action, params):
    """Pure-JAX f32 reference for correctness check."""
    w1, b1, w2, b2, w3, b3 = params
    x = jnp.concatenate([state, action], axis=1)
    h1 = jnp.maximum(x @ w1.T + b1, 0.0)
    h2 = jnp.maximum(h1 @ w2.T + b2, 0.0)
    return h2 @ w3.T + b3


if __name__ == "__main__":
    key = jax.random.PRNGKey(0)
    kp, ks, ka = jax.random.split(key, 3)

    B = 8
    params = init_params(kp)
    state = jax.random.normal(ks, (B, STATE_DIM), jnp.float32)
    action = jax.random.normal(ka, (B, ACT_DIM), jnp.float32)

    out = critic_forward(state, action, params)
    out = jax.block_until_ready(out)

    ref = critic_ref(state, action, params)
    assert out.shape == (B, OUT_DIM), out.shape
    # bf16 MXU operands (layers 1-2) with f32 accumulation -> loose tolerance.
    assert jnp.allclose(out, ref, atol=5e-2, rtol=5e-2), (out, ref)
    print("KERNEL_OK")
</pallas_src>

<mosaic_0001>
module attributes {stable_mosaic.version = 11 : i64} {
  func.func @critic_kernel(%arg0: i32, %arg1: memref<8x128xbf16, #tpu.memory_space<vmem>>, %arg2: memref<256x8xbf16, #tpu.memory_space<vmem>>, %arg3: memref<256x256xbf16, #tpu.memory_space<vmem>>, %arg4: memref<256x1xf32, #tpu.memory_space<vmem>>, %arg5: memref<8x256xf32, #tpu.memory_space<vmem>>, %arg6: memref<8x128xf32, #tpu.memory_space<vmem>>) attributes {dimension_semantics = [#tpu.dimension_semantics<parallel>], iteration_bounds = array<i64: 1>, scalar_prefetch = 0 : i64, scratch_operands = 0 : i64, tpu.core_type = #tpu.core_type<tc>, window_params = [{transform_indices = @transform_0, window_bounds = array<i64: 8, 128>}, {pipeline_mode = #tpu.pipeline_mode<synchronous>, transform_indices = @transform_1, window_bounds = array<i64: 256, 8>}, {pipeline_mode = #tpu.pipeline_mode<synchronous>, transform_indices = @transform_2, window_bounds = array<i64: 256, 256>}, {pipeline_mode = #tpu.pipeline_mode<synchronous>, transform_indices = @transform_3, window_bounds = array<i64: 256, 1>}, {pipeline_mode = #tpu.pipeline_mode<synchronous>, transform_indices = @transform_4, window_bounds = array<i64: 8, 256>}, {transform_indices = @transform_5, window_bounds = array<i64: 8, 128>}]} {
    %c0 = arith.constant 0 : index
    %c0_0 = arith.constant 0 : index
    %0 = vector.load %arg2[%c0, %c0_0] : memref<256x8xbf16, #tpu.memory_space<vmem>>, vector<256x8xbf16>
    %c0_1 = arith.constant 0 : index
    %c0_2 = arith.constant 0 : index
    %1 = vector.load %arg1[%c0_1, %c0_2] : memref<8x128xbf16, #tpu.memory_space<vmem>>, vector<8x128xbf16>
    %cst = arith.constant dense<0.000000e+00> : vector<256x128xf32>
    %2 = tpu.matmul %0, %1, %cst {dimension_numbers = #tpu.dot_dimension_numbers<[1], [0], [0], [1], [0, 0, 1, 1], [], []>} : vector<256x8xbf16>, vector<8x128xbf16>, vector<256x128xf32> -> vector<256x128xf32>
    %cst_3 = arith.constant 0.000000e+00 : f32
    %3 = vector.broadcast %cst_3 : f32 to vector<256x128xf32>
    %4 = arith.maximumf %2, %3 : vector<256x128xf32>
    %c0_4 = arith.constant 0 : index
    %c0_5 = arith.constant 0 : index
    %5 = vector.load %arg3[%c0_4, %c0_5] : memref<256x256xbf16, #tpu.memory_space<vmem>>, vector<256x256xbf16>
    %6 = arith.truncf %4 : vector<256x128xf32> to vector<256x128xbf16>
    %cst_6 = arith.constant dense<0.000000e+00> : vector<256x128xf32>
    %7 = tpu.matmul %5, %6, %cst_6 {dimension_numbers = #tpu.dot_dimension_numbers<[1], [0], [0], [1], [0, 0, 1, 1], [], []>} : vector<256x256xbf16>, vector<256x128xbf16>, vector<256x128xf32> -> vector<256x128xf32>
    %c0_7 = arith.constant 0 : index
    %c0_8 = arith.constant 0 : index
    %8 = vector.load %arg4[%c0_7, %c0_8] : memref<256x1xf32, #tpu.memory_space<vmem>>, vector<256x1xf32>
    %9 = vector.broadcast %8 : vector<256x1xf32> to vector<256x128xf32>
    %10 = arith.addf %7, %9 : vector<256x128xf32>
    %cst_9 = arith.constant 0.000000e+00 : f32
    %11 = vector.broadcast %cst_9 : f32 to vector<256x128xf32>
    %12 = arith.maximumf %10, %11 : vector<256x128xf32>
    %c0_10 = arith.constant 0 : index
    %c0_11 = arith.constant 0 : index
    %13 = vector.load %arg5[%c0_10, %c0_11] : memref<8x256xf32, #tpu.memory_space<vmem>>, vector<8x256xf32>
    %cst_12 = arith.constant dense<0.000000e+00> : vector<8x128xf32>
    %14 = tpu.matmul %13, %12, %cst_12 {dimension_numbers = #tpu.dot_dimension_numbers<[1], [0], [0], [1], [0, 0, 1, 1], [], []>} : vector<8x256xf32>, vector<256x128xf32>, vector<8x128xf32> -> vector<8x128xf32>
    %c0_13 = arith.constant 0 : index
    %c0_14 = arith.constant 0 : index
    %15 = vector.load %arg6[%c0_13, %c0_14] : memref<8x128xf32, #tpu.memory_space<vmem>>, vector<8x128xf32>
    tpu.vector_store %arg6[%c0_13, %c0_14], %14 {strides = array<i32>} : memref<8x128xf32, #tpu.memory_space<vmem>>, vector<8x128xf32>,
    return
  }
  func.func @transform_0(%arg0: i32) -> (i32, i32) {
    %c0_i32 = arith.constant 0 : i32
    %c0_i32_0 = arith.constant 0 : i32
    return %c0_i32, %arg0 : i32, i32
  }
  func.func @transform_1(%arg0: i32) -> (i32, i32) {
    %c0_i32 = arith.constant 0 : i32
    %c0_i32_0 = arith.constant 0 : i32
    %c0_i32_1 = arith.constant 0 : i32
    return %c0_i32, %c0_i32_0 : i32, i32
  }
  func.func @transform_2(%arg0: i32) -> (i32, i32) {
    %c0_i32 = arith.constant 0 : i32
    %c0_i32_0 = arith.constant 0 : i32
    %c0_i32_1 = arith.constant 0 : i32
    return %c0_i32, %c0_i32_0 : i32, i32
  }
  func.func @transform_3(%arg0: i32) -> (i32, i32) {
    %c0_i32 = arith.constant 0 : i32
    %c0_i32_0 = arith.constant 0 : i32
    %c0_i32_1 = arith.constant 0 : i32
    return %c0_i32, %c0_i32_0 : i32, i32
  }
  func.func @transform_4(%arg0: i32) -> (i32, i32) {
    %c0_i32 = arith.constant 0 : i32
    %c0_i32_0 = arith.constant 0 : i32
    %c0_i32_1 = arith.constant 0 : i32
    return %c0_i32, %c0_i32_0 : i32, i32
  }
  func.func @transform_5(%arg0: i32) -> (i32, i32) {
    %c0_i32 = arith.constant 0 : i32
    %c0_i32_0 = arith.constant 0 : i32
    return %c0_i32, %arg0 : i32, i32
  }
}

</mosaic_0001>

<llo_original>
// kernel: tpu_custom_call.1
$region0: #{tpu_custom_call.1}
  #allocation0 [shape = 'u32[]', space=smem, size = 0x4, offset = 0x4, fixed_abs, tag = 'smem constant byte address 0x4 - core index']
  #allocation1 [shape = 'u32[144,128]{1,0:T(1,128)}', space=vmem, size = 0x12000, scoped, tag = 'internal scratch']
  %s0 = inlined_call_operand.vmem [shape: bf16[8,128], index: 0, kind: input, shape index: {}]
  %s1 = inlined_call_operand.vmem [shape: bf16[256,8], index: 1, kind: input, shape index: {}]
  %s2 = inlined_call_operand.vmem [shape: bf16[256,256], index: 2, kind: input, shape index: {}]
  %s3 = inlined_call_operand.vmem [shape: f32[256,1], index: 3, kind: input, shape index: {}]
  %s4 = inlined_call_operand.vmem [shape: f32[8,256], index: 4, kind: input, shape index: {}]
  %s5 = inlined_call_operand.hbm [shape: f32[8,128], index: 5, kind: output, shape index: {}]
  %s6 = sld [smem:[#allocation0]]
  $region30: #{tpu_custom_call.1} parent=0
    _
  %s8 = ssub.s32 1, %s6
  %s9 = scalar_select 0, %s8, %s6
  $region1: #{tpu_custom_call.1} parent=0
    #allocation2 [shape = 'u8[4096]{0}', space=vmem, size = 0x1000, scoped, tag = 'output window, operand 0, single buffered']
    #allocation3 [shape = 's32[1]{0}', space=sflag, size = 0x4, scoped, tag = 'scoped memory for tpu_custom_call.1']
    %10 = vsyncpa [#allocation3], 0
    // Predicated region
    $region2: #{tpu_custom_call.1} parent=1 // pred_check
      _
    $region3: #{tpu_custom_call.1} parent=1 // pred_check_branch
      %12 = sbr.rel (0) target = $region5
    $region4: #{tpu_custom_call.1} parent=1 // pred_region
      _
    $region5: #{tpu_custom_call.1} parent=1 // pred_fallthru
      _
    // Predicated region
    $region6: #{tpu_custom_call.1} parent=1 // pred_check
      _
    $region7: #{tpu_custom_call.1} parent=1 // pred_check_branch
      %14 = sbr.rel (0) target = $region9
    $region8: #{tpu_custom_call.1} parent=1 // pred_region
      _
    $region9: #{tpu_custom_call.1} parent=1 // pred_fallthru
      _
    // Predicated region
    $region10: #{tpu_custom_call.1} parent=1 // pred_check
      _
    $region11: #{tpu_custom_call.1} parent=1 // pred_check_branch
      %16 = sbr.rel (0) target = $region13
    $region12: #{tpu_custom_call.1} parent=1 // pred_region
      _
    $region13: #{tpu_custom_call.1} parent=1 // pred_fallthru
      _
    // Predicated region
    $region14: #{tpu_custom_call.1} parent=1 // pred_check
      _
    $region15: #{tpu_custom_call.1} parent=1 // pred_check_branch
      %18 = sbr.rel (0) target = $region17
    $region16: #{tpu_custom_call.1} parent=1 // pred_region
      _
    $region17: #{tpu_custom_call.1} parent=1 // pred_fallthru
      _
    // Predicated region
    $region18: #{tpu_custom_call.1} parent=1 // pred_check
      _
    $region19: #{tpu_custom_call.1} parent=1 // pred_check_branch
      %20 = sbr.rel (0) target = $region21
    $region20: #{tpu_custom_call.1} parent=1 // pred_region
      _
    $region21: #{tpu_custom_call.1} parent=1 // pred_fallthru
      _
    %v22 = vld [vmem:[%s1] sm:$0xf]
    %v23 = vld [vmem:[%s1 + $0x4] sm:$0xf]
    %v24 = vld [vmem:[%s1 + $0x8] sm:$0xf]
    %v25 = vld [vmem:[%s1 + $0xc] sm:$0xf]
    %v26 = vld [vmem:[%s1 + $0x10] sm:$0xf]
    %v27 = vld [vmem:[%s1 + $0x14] sm:$0xf]
    %v28 = vld [vmem:[%s1 + $0x18] sm:$0xf]
    %v29 = vld [vmem:[%s1 + $0x1c] sm:$0xf]
    %v30 = vld [vmem:[%s1 + $0x20] sm:$0xf]
    %v31 = vld [vmem:[%s1 + $0x24] sm:$0xf]
    %v32 = vld [vmem:[%s1 + $0x28] sm:$0xf]
    %v33 = vld [vmem:[%s1 + $0x2c] sm:$0xf]
    %v34 = vld [vmem:[%s1 + $0x30] sm:$0xf]
    %v35 = vld [vmem:[%s1 + $0x34] sm:$0xf]
    %v36 = vld [vmem:[%s1 + $0x38] sm:$0xf]
    %v37 = vld [vmem:[%s1 + $0x3c] sm:$0xf]
    %v38 = vld [vmem:[%s1 + $0x40] sm:$0xf]
    %v39 = vld [vmem:[%s1 + $0x44] sm:$0xf]
    %v40 = vld [vmem:[%s1 + $0x48] sm:$0xf]
    %v41 = vld [vmem:[%s1 + $0x4c] sm:$0xf]
    %v42 = vld [vmem:[%s1 + $0x50] sm:$0xf]
    %v43 = vld [vmem:[%s1 + $0x54] sm:$0xf]
    %v44 = vld [vmem:[%s1 + $0x58] sm:$0xf]
    %v45 = vld [vmem:[%s1 + $0x5c] sm:$0xf]
    %v46 = vld [vmem:[%s1 + $0x60] sm:$0xf]
    %v47 = vld [vmem:[%s1 + $0x64] sm:$0xf]
    %v48 = vld [vmem:[%s1 + $0x68] sm:$0xf]
    %v49 = vld [vmem:[%s1 + $0x6c] sm:$0xf]
    %v50 = vld [vmem:[%s1 + $0x70] sm:$0xf]
    %v51 = vld [vmem:[%s1 + $0x74] sm:$0xf]
    %v52 = vld [vmem:[%s1 + $0x78] sm:$0xf]
    %v53 = vld [vmem:[%s1 + $0x7c] sm:$0xf]
    %v54 = vld [vmem:[%s0] sm:$0xf]
    %v87 = vunpack.c.l.b16 %v22
    %v88 = vunpack.c.l.b16 %v23
    %v89 = vunpack.c.l.b16 %v24
    %v90 = vunpack.c.l.b16 %v25
    %v91 = vunpack.c.l.b16 %v26
    %v92 = vunpack.c.l.b16 %v27
    %v93 = vunpack.c.l.b16 %v28
    %v94 = vunpack.c.l.b16 %v29
    %v95 = vunpack.c.l.b16 %v30
    %v96 = vunpack.c.l.b16 %v31
    %v97 = vunpack.c.l.b16 %v32
    %v98 = vunpack.c.l.b16 %v33
    %v99 = vunpack.c.l.b16 %v34
    %v100 = vunpack.c.l.b16 %v35
    %v101 = vunpack.c.l.b16 %v36
    %v102 = vunpack.c.l.b16 %v37
    %v103 = vunpack.c.l.b16 %v38
    %v104 = vunpack.c.l.b16 %v39
    %v105 = vunpack.c.l.b16 %v40
    %v106 = vunpack.c.l.b16 %v41
    %v107 = vunpack.c.l.b16 %v42
    %v108 = vunpack.c.l.b16 %v43
    %v109 = vunpack.c.l.b16 %v44
    %v110 = vunpack.c.l.b16 %v45
    %v111 = vunpack.c.l.b16 %v46
    %v112 = vunpack.c.l.b16 %v47
    %v113 = vunpack.c.l.b16 %v48
    %v114 = vunpack.c.l.b16 %v49
    %v115 = vunpack.c.l.b16 %v50
    %v116 = vunpack.c.l.b16 %v51
    %v117 = vunpack.c.l.b16 %v52
    %v118 = vunpack.c.l.b16 %v53
    %v119 = vpack.c.b16 %v88, %v87
    %v120 = vpack.c.b16 %v90, %v89
    %v121 = vpack.c.b16 %v92, %v91
    %v122 = vpack.c.b16 %v94, %v93
    %v123 = vpack.c.b16 %v96, %v95
    %v124 = vpack.c.b16 %v98, %v97
    %v125 = vpack.c.b16 %v100, %v99
    %v126 = vpack.c.b16 %v102, %v101
    %v127 = vpack.c.b16 %v104, %v103
    %v128 = vpack.c.b16 %v106, %v105
    %v129 = vpack.c.b16 %v108, %v107
    %v130 = vpack.c.b16 %v110, %v109
    %v131 = vpack.c.b16 %v112, %v111
    %v132 = vpack.c.b16 %v114, %v113
    %v133 = vpack.c.b16 %v116, %v115
    %v134 = vpack.c.b16 %v118, %v117
    %vm135 = vcmask 64512
    %v137 = vsel %vm135, %v119, 0
    %v140 = vsel %vm135, %v120, 0
    %v143 = vsel %vm135, %v121, 0
    %v146 = vsel %vm135, %v122, 0
    %v149 = vsel %vm135, %v123, 0
    %v152 = vsel %vm135, %v124, 0
    %v155 = vsel %vm135, %v125, 0
    %v158 = vsel %vm135, %v126, 0
    %v161 = vsel %vm135, %v127, 0
    %v164 = vsel %vm135, %v128, 0
    %v167 = vsel %vm135, %v129, 0
    %v170 = vsel %vm135, %v130, 0
    %v173 = vsel %vm135, %v131, 0
    %v176 = vsel %vm135, %v132, 0
    %v179 = vsel %vm135, %v133, 0
    %v182 = vsel %vm135, %v134, 0
    %vm184 = vcmask 1043456
    %v186 = vsel %vm184, %v54, 0
    %188 = vmatprep.subr.bf16.mxu0 0
    %189 = vmatpush1.bf16.msra.mxu0 %v186
    %190 = vmatprep.subr.bf16.mxu0 0
    %191 = vmatpush1.bf16.msra.mxu0 0
    %192 = vmatprep.subr.bf16.mxu0 0
    %193 = vmatpush1.bf16.msra.mxu0 0
    %194 = vmatprep.subr.bf16.mxu0 0
    %195 = vmatpush1.bf16.msra.mxu0 0
    %196 = vmatprep.subr.bf16.mxu0 0
    %197 = vmatpush1.bf16.msra.mxu0 0
    %198 = vmatprep.subr.bf16.mxu0 0
    %199 = vmatpush1.bf16.msra.mxu0 0
    %200 = vmatprep.subr.bf16.mxu0 0
    %201 = vmatpush1.bf16.msra.mxu0 0
    %202 = vmatprep.subr.bf16.mxu0 0
    %203 = vmatpush1.bf16.msra.mxu0 0
    %204 = vmatprep.subr.bf16.mxu0 0
    %205 = vmatpush1.bf16.msra.mxu0 0
    %206 = vmatprep.subr.bf16.mxu0 0
    %207 = vmatpush1.bf16.msra.mxu0 0
    %208 = vmatprep.subr.bf16.mxu0 0
    %209 = vmatpush1.bf16.msra.mxu0 0
    %210 = vmatprep.subr.bf16.mxu0 0
    %211 = vmatpush1.bf16.msra.mxu0 0
    %212 = vmatprep.subr.bf16.mxu0 0
    %213 = vmatpush1.bf16.msra.mxu0 0
    %214 = vmatprep.subr.bf16.mxu0 0
    %215 = vmatpush1.bf16.msra.mxu0 0
    %216 = vmatprep.subr.bf16.mxu0 0
    %217 = vmatpush1.bf16.msra.mxu0 0
    %218 = vmatprep.subr.bf16.mxu0 0
    %219 = vmatpush1.bf16.msra.mxu0 0
    %220 = vmatprep.mubr.bf16.mxu0 0
    %221 = vmatmul.mubr.bf16.gmra.mrb[0].mxu0 %v137
    %v222 = vpop.f32.mrb[0].mxu0
    %v223 = vadd.f32 0.0, %v222
    %v224 = vpop.f32.mrb[0].mxu0
    %v225 = vpop.f32.mrb[0].mxu0
    %v226 = vadd.f32 0.0, %v225
    %v227 = vpop.f32.mrb[0].mxu0
    %228 = vmatprep.mubr.bf16.mxu0 0
    %229 = vmatmul.mubr.bf16.gmra.mrb[0].mxu0 %v140
    %v230 = vpop.f32.mrb[0].mxu0
    %v231 = vadd.f32 0.0, %v230
    %v232 = vpop.f32.mrb[0].mxu0
    %v233 = vpop.f32.mrb[0].mxu0
    %v234 = vadd.f32 0.0, %v233
    %v235 = vpop.f32.mrb[0].mxu0
    %236 = vmatprep.mubr.bf16.mxu0 0
    %237 = vmatmul.mubr.bf16.gmra.mrb[0].mxu0 %v143
    %v238 = vpop.f32.mrb[0].mxu0
    %v239 = vadd.f32 0.0, %v238
    %v240 = vpop.f32.mrb[0].mxu0
    %v241 = vpop.f32.mrb[0].mxu0
    %v242 = vadd.f32 0.0, %v241
    %v243 = vpop.f32.mrb[0].mxu0
    %244 = vmatprep.mubr.bf16.mxu0 0
    %245 = vmatmul.mubr.bf16.gmra.mrb[0].mxu0 %v146
    %v246 = vpop.f32.mrb[0].mxu0
    %v247 = vadd.f32 0.0, %v246
    %v248 = vpop.f32.mrb[0].mxu0
    %v249 = vpop.f32.mrb[0].mxu0
    %v250 = vadd.f32 0.0, %v249
    %v251 = vpop.f32.mrb[0].mxu0
    %252 = vmatprep.mubr.bf16.mxu0 0
    %253 = vmatmul.mubr.bf16.gmra.mrb[0].mxu0 %v149
    %v254 = vpop.f32.mrb[0].mxu0
    %v255 = vadd.f32 0.0, %v254
    %v256 = vpop.f32.mrb[0].mxu0
    %v257 = vpop.f32.mrb[0].mxu0
    %v258 = vadd.f32 0.0, %v257
    %v259 = vpop.f32.mrb[0].mxu0
    %260 = vmatprep.mubr.bf16.mxu0 0
    %261 = vmatmul.mubr.bf16.gmra.mrb[0].mxu0 %v152
    %v262 = vpop.f32.mrb[0].mxu0
    %v263 = vadd.f32 0.0, %v262
    %v264 = vpop.f32.mrb[0].mxu0
    %v265 = vpop.f32.mrb[0].mxu0
    %v266 = vadd.f32 0.0, %v265
    %v267 = vpop.f32.mrb[0].mxu0
    %268 = vmatprep.mubr.bf16.mxu0 0
    %269 = vmatmul.mubr.bf16.gmra.mrb[0].mxu0 %v155
    %v270 = vpop.f32.mrb[0].mxu0
    %v271 = vadd.f32 0.0, %v270
    %v272 = vpop.f32.mrb[0].mxu0
    %v273 = vpop.f32.mrb[0].mxu0
    %v274 = vadd.f32 0.0, %v273
    %v275 = vpop.f32.mrb[0].mxu0
    %276 = vmatprep.mubr.bf16.mxu0 0
    %277 = vmatmul.mubr.bf16.gmra.mrb[0].mxu0 %v158
    %v278 = vpop.f32.mrb[0].mxu0
    %v279 = vadd.f32 0.0, %v278
    %v280 = vpop.f32.mrb[0].mxu0
    %v281 = vpop.f32.mrb[0].mxu0
    %v282 = vadd.f32 0.0, %v281
    %v283 = vpop.f32.mrb[0].mxu0
    %284 = vmatprep.mubr.bf16.mxu0 0
    %285 = vmatmul.mubr.bf16.gmra.mrb[0].mxu0 %v161
    %v286 = vpop.f32.mrb[0].mxu0
    %v287 = vadd.f32 0.0, %v286
    %v288 = vpop.f32.mrb[0].mxu0
    %v289 = vpop.f32.mrb[0].mxu0
    %v290 = vadd.f32 0.0, %v289
    %v291 = vpop.f32.mrb[0].mxu0
    %292 = vmatprep.mubr.bf16.mxu0 0
    %293 = vmatmul.mubr.bf16.gmra.mrb[0].mxu0 %v164
    %v294 = vpop.f32.mrb[0].mxu0
    %v295 = vadd.f32 0.0, %v294
    %v296 = vpop.f32.mrb[0].mxu0
    %v297 = vpop.f32.mrb[0].mxu0
    %v298 = vadd.f32 0.0, %v297
    %v299 = vpop.f32.mrb[0].mxu0
    %300 = vmatprep.mubr.bf16.mxu0 0
    %301 = vmatmul.mubr.bf16.gmra.mrb[0].mxu0 %v167
    %v302 = vpop.f32.mrb[0].mxu0
    %v303 = vadd.f32 0.0, %v302
    %v304 = vpop.f32.mrb[0].mxu0
    %v305 = vpop.f32.mrb[0].mxu0
    %v306 = vadd.f32 0.0, %v305
    %v307 = vpop.f32.mrb[0].mxu0
    %308 = vmatprep.mubr.bf16.mxu0 0
    %309 = vmatmul.mubr.bf16.gmra.mrb[0].mxu0 %v170
    %v310 = vpop.f32.mrb[0].mxu0
    %v311 = vadd.f32 0.0, %v310
    %v312 = vpop.f32.mrb[0].mxu0
    %v313 = vpop.f32.mrb[0].mxu0
    %v314 = vadd.f32 0.0, %v313
    %v315 = vpop.f32.mrb[0].mxu0
    %316 = vmatprep.mubr.bf16.mxu0 0
    %317 = vmatmul.mubr.bf16.gmra.mrb[0].mxu0 %v173
    %v318 = vpop.f32.mrb[0].mxu0
    %v319 = vadd.f32 0.0, %v318
    %v320 = vpop.f32.mrb[0].mxu0
    %v321 = vpop.f32.mrb[0].mxu0
    %v322 = vadd.f32 0.0, %v321
    %v323 = vpop.f32.mrb[0].mxu0
    %324 = vmatprep.mubr.bf16.mxu0 0
    %325 = vmatmul.mubr.bf16.gmra.mrb[0].mxu0 %v176
    %v326 = vpop.f32.mrb[0].mxu0
    %v327 = vadd.f32 0.0, %v326
    %v328 = vpop.f32.mrb[0].mxu0
    %v329 = vpop.f32.mrb[0].mxu0
    %v330 = vadd.f32 0.0, %v329
    %v331 = vpop.f32.mrb[0].mxu0
    %332 = vmatprep.mubr.bf16.mxu0 0
    %333 = vmatmul.mubr.bf16.gmra.mrb[0].mxu0 %v179
    %v334 = vpop.f32.mrb[0].mxu0
    %v335 = vadd.f32 0.0, %v334
    %v336 = vpop.f32.mrb[0].mxu0
    %v337 = vpop.f32.mrb[0].mxu0
    %v338 = vadd.f32 0.0, %v337
    %v339 = vpop.f32.mrb[0].mxu0
    %340 = vmatprep.mubr.bf16.mxu0 0
    %341 = vmatmul.mubr.bf16.gmra.mrb[0].mxu0 %v182
    %v342 = vpop.f32.mrb[0].mxu0
    %v343 = vadd.f32 0.0, %v342
    %v344 = vpop.f32.mrb[0].mxu0
    %v345 = vpop.f32.mrb[0].mxu0
    %v346 = vadd.f32 0.0, %v345
    %v347 = vpop.f32.mrb[0].mxu0
    %348 = vdwg.mxu0
    %v349 = vmax.f32 %v223, 0.0
    %v350 = vmax.f32 %v226, 0.0
    %v351 = vmax.f32 %v231, 0.0
    %v352 = vmax.f32 %v234, 0.0
    %v353 = vmax.f32 %v239, 0.0
    %v354 = vmax.f32 %v242, 0.0
    %v355 = vmax.f32 %v247, 0.0
    %v356 = vmax.f32 %v250, 0.0
    %v357 = vmax.f32 %v255, 0.0
    %v358 = vmax.f32 %v258, 0.0
    %v359 = vmax.f32 %v263, 0.0
    %v360 = vmax.f32 %v266, 0.0
    %v361 = vmax.f32 %v271, 0.0
    %v362 = vmax.f32 %v274, 0.0
    %v363 = vmax.f32 %v279, 0.0
    %v364 = vmax.f32 %v282, 0.0
    %v365 = vmax.f32 %v287, 0.0
    %v366 = vmax.f32 %v290, 0.0
    %v367 = vmax.f32 %v295, 0.0
    %v368 = vmax.f32 %v298, 0.0
    %v369 = vmax.f32 %v303, 0.0
    %v370 = vmax.f32 %v306, 0.0
    %v371 = vmax.f32 %v311, 0.0
    %v372 = vmax.f32 %v314, 0.0
    %v373 = vmax.f32 %v319, 0.0
    %v374 = vmax.f32 %v322, 0.0
    %v375 = vmax.f32 %v327, 0.0
    %v376 = vmax.f32 %v330, 0.0
    %v377 = vmax.f32 %v335, 0.0
    %v378 = vmax.f32 %v338, 0.0
    %v379 = vmax.f32 %v343, 0.0
    %v380 = vmax.f32 %v346, 0.0
    %v381 = vld [vmem:[%s2] sm:$0xff]
    %v382 = vld [vmem:[%s2 + $0x8] sm:$0xff]
    %v383 = vld [vmem:[%s2 + $0x10] sm:$0xff]
    %v384 = vld [vmem:[%s2 + $0x18] sm:$0xff]
    %v385 = vld [vmem:[%s2 + $0x20] sm:$0xff]
    %v386 = vld [vmem:[%s2 + $0x28] sm:$0xff]
    %v387 = vld [vmem:[%s2 + $0x30] sm:$0xff]
    %v388 = vld [vmem:[%s2 + $0x38] sm:$0xff]
    %v389 = vld [vmem:[%s2 + $0x40] sm:$0xff]
    %v390 = vld [vmem:[%s2 + $0x48] sm:$0xff]
    %v391 = vld [vmem:[%s2 + $0x50] sm:$0xff]
    %v392 = vld [vmem:[%s2 + $0x58] sm:$0xff]
    %v393 = vld [vmem:[%s2 + $0x60] sm:$0xff]
    %v394 = vld [vmem:[%s2 + $0x68] sm:$0xff]
    %v395 = vld [vmem:[%s2 + $0x70] sm:$0xff]
    %v396 = vld [vmem:[%s2 + $0x78] sm:$0xff]
    %v397 = vld [vmem:[%s2 + $0x80] sm:$0xff]
    %v398 = vld [vmem:[%s2 + $0x88] sm:$0xff]
    %v399 = vld [vmem:[%s2 + $0x90] sm:$0xff]
    %v400 = vld [vmem:[%s2 + $0x98] sm:$0xff]
    %v401 = vld [vmem:[%s2 + $0xa0] sm:$0xff]
    %v402 = vld [vmem:[%s2 + $0xa8] sm:$0xff]
    %v403 = vld [vmem:[%s2 + $0xb0] sm:$0xff]
    %v404 = vld [vmem:[%s2 + $0xb8] sm:$0xff]
    %v405 = vld [vmem:[%s2 + $0xc0] sm:$0xff]
    %v406 = vld [vmem:[%s2 + $0xc8] sm:$0xff]
    %v407 = vld [vmem:[%s2 + $0xd0] sm:$0xff]
    %v408 = vld [vmem:[%s2 + $0xd8] sm:$0xff]
    %v409 = vld [vmem:[%s2 + $0xe0] sm:$0xff]
    %v410 = vld [vmem:[%s2 + $0xe8] sm:$0xff]
    %v411 = vld [vmem:[%s2 + $0xf0] sm:$0xff]
    %v412 = vld [vmem:[%s2 + $0xf8] sm:$0xff]
    %v413 = vpack.c.bf16 %v350, %v349
    %v414 = vpack.c.bf16 %v352, %v351
    %v415 = vpack.c.bf16 %v354, %v353
    %v416 = vpack.c.bf16 %v356, %v355
    %v417 = vpack.c.bf16 %v358, %v357
    %v418 = vpack.c.bf16 %v360, %v359
    %v419 = vpack.c.bf16 %v362, %v361
    %v420 = vpack.c.bf16 %v364, %v363
    %v421 = vpack.c.bf16 %v366, %v365
    %v422 = vpack.c.bf16 %v368, %v367
    %v423 = vpack.c.bf16 %v370, %v369
    %v424 = vpack.c.bf16 %v372, %v371
    %v425 = vpack.c.bf16 %v374, %v373
    %v426 = vpack.c.bf16 %v376, %v375
    %v427 = vpack.c.bf16 %v378, %v377
    %v428 = vpack.c.bf16 %v380, %v379
    %v429 = vld [vmem:[%s3] sm:$0xff]
    %v430 = vld [vmem:[%s3 + $0x8] sm:$0xff]
    %v431 = vld [vmem:[%s3 + $0x10] sm:$0xff]
    %v432 = vld [vmem:[%s3 + $0x18] sm:$0xff]
    %v433 = vld [vmem:[%s3 + $0x20] sm:$0xff]
    %v434 = vld [vmem:[%s3 + $0x28] sm:$0xff]
    %v435 = vld [vmem:[%s3 + $0x30] sm:$0xff]
    %v436 = vld [vmem:[%s3 + $0x38] sm:$0xff]
    %v437 = vld [vmem:[%s3 + $0x40] sm:$0xff]
    %v438 = vld [vmem:[%s3 + $0x48] sm:$0xff]
    %v439 = vld [vmem:[%s3 + $0x50] sm:$0xff]
    %v440 = vld [vmem:[%s3 + $0x58] sm:$0xff]
    %v441 = vld [vmem:[%s3 + $0x60] sm:$0xff]
    %v442 = vld [vmem:[%s3 + $0x68] sm:$0xff]
    %v443 = vld [vmem:[%s3 + $0x70] sm:$0xff]
    %v444 = vld [vmem:[%s3 + $0x78] sm:$0xff]
    %v445 = vld [vmem:[%s3 + $0x80] sm:$0xff]
    %v446 = vld [vmem:[%s3 + $0x88] sm:$0xff]
    %v447 = vld [vmem:[%s3 + $0x90] sm:$0xff]
    %v448 = vld [vmem:[%s3 + $0x98] sm:$0xff]
    %v449 = vld [vmem:[%s3 + $0xa0] sm:$0xff]
    %v450 = vld [vmem:[%s3 + $0xa8] sm:$0xff]
    %v451 = vld [vmem:[%s3 + $0xb0] sm:$0xff]
    %v452 = vld [vmem:[%s3 + $0xb8] sm:$0xff]
    %v453 = vld [vmem:[%s3 + $0xc0] sm:$0xff]
    %v454 = vld [vmem:[%s3 + $0xc8] sm:$0xff]
    %v455 = vld [vmem:[%s3 + $0xd0] sm:$0xff]
    %v456 = vld [vmem:[%s3 + $0xd8] sm:$0xff]
    %v457 = vld [vmem:[%s3 + $0xe0] sm:$0xff]
    %v458 = vld [vmem:[%s3 + $0xe8] sm:$0xff]
    %v459 = vld [vmem:[%s3 + $0xf0] sm:$0xff]
    %v460 = vld [vmem:[%s3 + $0xf8] sm:$0xff]
    %462 = vset.pattern.permute.xlu0 0
    %463 = vperm.xlu0 %462, %v429
    %v464 = vpop.permute.xlu0 %463
    %467 = vset.pattern.permute.xlu0 0
    %468 = vperm.xlu0 %467, %v430
    %v469 = vpop.permute.xlu0 %468
    %472 = vset.pattern.permute.xlu0 0
    %473 = vperm.xlu0 %472, %v431
    %v474 = vpop.permute.xlu0 %473
    %477 = vset.pattern.permute.xlu0 0
    %478 = vperm.xlu0 %477, %v432
    %v479 = vpop.permute.xlu0 %478
    %482 = vset.pattern.permute.xlu0 0
    %483 = vperm.xlu0 %482, %v433
    %v484 = vpop.permute.xlu0 %483
    %487 = vset.pattern.permute.xlu0 0
    %488 = vperm.xlu0 %487, %v434
    %v489 = vpop.permute.xlu0 %488
    %492 = vset.pattern.permute.xlu0 0
    %493 = vperm.xlu0 %492, %v435
    %v494 = vpop.permute.xlu0 %493
    %497 = vset.pattern.permute.xlu0 0
    %498 = vperm.xlu0 %497, %v436
    %v499 = vpop.permute.xlu0 %498
    %502 = vset.pattern.permute.xlu0 0
    %503 = vperm.xlu0 %502, %v437
    %v504 = vpop.permute.xlu0 %503
    %507 = vset.pattern.permute.xlu0 0
    %508 = vperm.xlu0 %507, %v438
    %v509 = vpop.permute.xlu0 %508
    %512 = vset.pattern.permute.xlu0 0
    %513 = vperm.xlu0 %512, %v439
    %v514 = vpop.permute.xlu0 %513
    %517 = vset.pattern.permute.xlu0 0
    %518 = vperm.xlu0 %517, %v440
    %v519 = vpop.permute.xlu0 %518
    %522 = vset.pattern.permute.xlu0 0
    %523 = vperm.xlu0 %522, %v441
    %v524 = vpop.permute.xlu0 %523
    %527 = vset.pattern.permute.xlu0 0
    %528 = vperm.xlu0 %527, %v442
    %v529 = vpop.permute.xlu0 %528
    %532 = vset.pattern.permute.xlu0 0
    %533 = vperm.xlu0 %532, %v443
    %v534 = vpop.permute.xlu0 %533
    %537 = vset.pattern.permute.xlu0 0
    %538 = vperm.xlu0 %537, %v444
    %v539 = vpop.permute.xlu0 %538
    %542 = vset.pattern.permute.xlu0 0
    %543 = vperm.xlu0 %542, %v445
    %v544 = vpop.permute.xlu0 %543
    %547 = vset.pattern.permute.xlu0 0
    %548 = vperm.xlu0 %547, %v446
    %v549 = vpop.permute.xlu0 %548
    %552 = vset.pattern.permute.xlu0 0
    %553 = vperm.xlu0 %552, %v447
    %v554 = vpop.permute.xlu0 %553
    %557 = vset.pattern.permute.xlu0 0
    %558 = vperm.xlu0 %557, %v448
    %v559 = vpop.permute.xlu0 %558
    %562 = vset.pattern.permute.xlu0 0
    %563 = vperm.xlu0 %562, %v449
    %v564 = vpop.permute.xlu0 %563
    %567 = vset.pattern.permute.xlu0 0
    %568 = vperm.xlu0 %567, %v450
    %v569 = vpop.permute.xlu0 %568
    %572 = vset.pattern.permute.xlu0 0
    %573 = vperm.xlu0 %572, %v451
    %v574 = vpop.permute.xlu0 %573
    %577 = vset.pattern.permute.xlu0 0
    %578 = vperm.xlu0 %577, %v452
    %v579 = vpop.permute.xlu0 %578
    %582 = vset.pattern.permute.xlu0 0
    %583 = vperm.xlu0 %582, %v453
    %v584 = vpop.permute.xlu0 %583
    %587 = vset.pattern.permute.xlu0 0
    %588 = vperm.xlu0 %587, %v454
    %v589 = vpop.permute.xlu0 %588
    %592 = vset.pattern.permute.xlu0 0
    %593 = vperm.xlu0 %592, %v455
    %v594 = vpop.permute.xlu0 %593
    %597 = vset.pattern.permute.xlu0 0
    %598 = vperm.xlu0 %597, %v456
    %v599 = vpop.permute.xlu0 %598
    %602 = vset.pattern.permute.xlu0 0
    %603 = vperm.xlu0 %602, %v457
    %v604 = vpop.permute.xlu0 %603
    %607 = vset.pattern.permute.xlu0 0
    %608 = vperm.xlu0 %607, %v458
    %v609 = vpop.permute.xlu0 %608
    %612 = vset.pattern.permute.xlu0 0
    %613 = vperm.xlu0 %612, %v459
    %v614 = vpop.permute.xlu0 %613
    %617 = vset.pattern.permute.xlu0 0
    %618 = vperm.xlu0 %617, %v460
    %v619 = vpop.permute.xlu0 %618
    %v653 = vunpack.c.l.b16 %v381
    %v654 = vunpack.c.h.b16 %v381
    %v655 = vunpack.c.l.b16 %v382
    %v656 = vunpack.c.h.b16 %v382
    %v657 = vunpack.c.l.b16 %v383
    %v658 = vunpack.c.h.b16 %v383
    %v659 = vunpack.c.l.b16 %v384
    %v660 = vunpack.c.h.b16 %v384
    %v661 = vunpack.c.l.b16 %v385
    %v662 = vunpack.c.h.b16 %v385
    %v663 = vunpack.c.l.b16 %v386
    %v664 = vunpack.c.h.b16 %v386
    %v665 = vunpack.c.l.b16 %v387
    %v666 = vunpack.c.h.b16 %v387
    %v667 = vunpack.c.l.b16 %v388
    %v668 = vunpack.c.h.b16 %v388
    %v669 = vunpack.c.l.b16 %v389
    %v670 = vunpack.c.h.b16 %v389
    %v671 = vunpack.c.l.b16 %v390
    %v672 = vunpack.c.h.b16 %v390
    %v673 = vunpack.c.l.b16 %v391
    %v674 = vunpack.c.h.b16 %v391
    %v675 = vunpack.c.l.b16 %v392
    %v676 = vunpack.c.h.b16 %v392
    %v677 = vunpack.c.l.b16 %v393
    %v678 = vunpack.c.h.b16 %v393
    %v679 = vunpack.c.l.b16 %v394
    %v680 = vunpack.c.h.b16 %v394
    %v681 = vunpack.c.l.b16 %v395
    %v682 = vunpack.c.h.b16 %v395
    %v683 = vunpack.c.l.b16 %v396
    %v684 = vunpack.c.h.b16 %v396
    %v685 = vunpack.c.l.b16 %v397
    %v686 = vunpack.c.h.b16 %v397
    %v687 = vunpack.c.l.b16 %v398
    %v688 = vunpack.c.h.b16 %v398
    %v689 = vunpack.c.l.b16 %v399
    %v690 = vunpack.c.h.b16 %v399
    %v691 = vunpack.c.l.b16 %v400
    %v692 = vunpack.c.h.b16 %v400
    %v693 = vunpack.c.l.b16 %v401
    %v694 = vunpack.c.h.b16 %v401
    %v695 = vunpack.c.l.b16 %v402
    %v696 = vunpack.c.h.b16 %v402
    %v697 = vunpack.c.l.b16 %v403
    %v698 = vunpack.c.h.b16 %v403
    %v699 = vunpack.c.l.b16 %v404
    %v700 = vunpack.c.h.b16 %v404
    %v701 = vunpack.c.l.b16 %v405
    %v702 = vunpack.c.h.b16 %v405
    %v703 = vunpack.c.l.b16 %v406
    %v704 = vunpack.c.h.b16 %v406
    %v705 = vunpack.c.l.b16 %v407
    %v706 = vunpack.c.h.b16 %v407
    %v707 = vunpack.c.l.b16 %v408
    %v708 = vunpack.c.h.b16 %v408
    %v709 = vunpack.c.l.b16 %v409
    %v710 = vunpack.c.h.b16 %v409
    %v711 = vunpack.c.l.b16 %v410
    %v712 = vunpack.c.h.b16 %v410
    %v713 = vunpack.c.l.b16 %v411
    %v714 = vunpack.c.h.b16 %v411
    %v715 = vunpack.c.l.b16 %v412
    %v716 = vunpack.c.h.b16 %v412
    %v717 = vpack.c.b16 %v655, %v653
    %v718 = vpack.c.b16 %v656, %v654
    %v719 = vpack.c.b16 %v659, %v657
    %v720 = vpack.c.b16 %v660, %v658
    %v721 = vpack.c.b16 %v663, %v661
    %v722 = vpack.c.b16 %v664, %v662
    %v723 = vpack.c.b16 %v667, %v665
    %v724 = vpack.c.b16 %v668, %v666
    %v725 = vpack.c.b16 %v671, %v669
    %v726 = vpack.c.b16 %v672, %v670
    %v727 = vpack.c.b16 %v675, %v673
    %v728 = vpack.c.b16 %v676, %v674
    %v729 = vpack.c.b16 %v679, %v677
    %v730 = vpack.c.b16 %v680, %v678
    %v731 = vpack.c.b16 %v683, %v681
    %v732 = vpack.c.b16 %v684, %v682
    %v733 = vpack.c.b16 %v687, %v685
    %v734 = vpack.c.b16 %v688, %v686
    %v735 = vpack.c.b16 %v691, %v689
    %v736 = vpack.c.b16 %v692, %v690
    %v737 = vpack.c.b16 %v695, %v693
    %v738 = vpack.c.b16 %v696, %v694
    %v739 = vpack.c.b16 %v699, %v697
    %v740 = vpack.c.b16 %v700, %v698
    %v741 = vpack.c.b16 %v703, %v701
    %v742 = vpack.c.b16 %v704, %v702
    %v743 = vpack.c.b16 %v707, %v705
    %v744 = vpack.c.b16 %v708, %v706
    %v745 = vpack.c.b16 %v711, %v709
    %v746 = vpack.c.b16 %v712, %v710
    %v747 = vpack.c.b16 %v715, %v713
    %v748 = vpack.c.b16 %v716, %v714
    %781 = vmatprep.subr.bf16.mxu0 0
    %782 = vmatpush1.bf16.msra.mxu0 %v413
    %783 = vmatprep.subr.bf16.mxu0 0
    %784 = vmatpush1.bf16.msra.mxu0 %v414
    %785 = vmatprep.subr.bf16.mxu0 0
    %786 = vmatpush1.bf16.msra.mxu0 %v415
    %787 = vmatprep.subr.bf16.mxu0 0
    %788 = vmatpush1.bf16.msra.mxu0 %v416
    %789 = vmatprep.subr.bf16.mxu0 0
    %790 = vmatpush1.bf16.msra.mxu0 %v417
    %791 = vmatprep.subr.bf16.mxu0 0
    %792 = vmatpush1.bf16.msra.mxu0 %v418
    %793 = vmatprep.subr.bf16.mxu0 0
    %794 = vmatpush1.bf16.msra.mxu0 %v419
    %795 = vmatprep.subr.bf16.mxu0 0
    %796 = vmatpush1.bf16.msra.mxu0 %v420
    %797 = vmatprep.subr.bf16.mxu0 0
    %798 = vmatpush1.bf16.msra.mxu0 %v421
    %799 = vmatprep.subr.bf16.mxu0 0
    %800 = vmatpush1.bf16.msra.mxu0 %v422
    %801 = vmatprep.subr.bf16.mxu0 0
    %802 = vmatpush1.bf16.msra.mxu0 %v423
    %803 = vmatprep.subr.bf16.mxu0 0
    %804 = vmatpush1.bf16.msra.mxu0 %v424
    %805 = vmatprep.subr.bf16.mxu0 0
    %806 = vmatpush1.bf16.msra.mxu0 %v425
    %807 = vmatprep.subr.bf16.mxu0 0
    %808 = vmatpush1.bf16.msra.mxu0 %v426
    %809 = vmatprep.subr.bf16.mxu0 0
    %810 = vmatpush1.bf16.msra.mxu0 %v427
    %811 = vmatprep.subr.bf16.mxu0 0
    %812 = vmatpush1.bf16.msra.mxu0 %v428
    %813 = vmatprep.mubr.bf16.mxu0 %v718
    %814 = vmatmul.mubr.bf16.gmra.mrb[0].mxu0 %v717
    %v815 = vpop.f32.mrb[0].mxu0
    %v816 = vadd.f32 %v464, %v815
    %v817 = vpop.f32.mrb[0].mxu0
    %v818 = vpop.f32.mrb[0].mxu0
    %v819 = vadd.f32 %v469, %v818
    %v820 = vpop.f32.mrb[0].mxu0
    %821 = vmatprep.mubr.bf16.mxu0 %v720
    %822 = vmatmul.mubr.bf16.gmra.mrb[0].mxu0 %v719
    %v823 = vpop.f32.mrb[0].mxu0
    %v824 = vadd.f32 %v474, %v823
    %v825 = vpop.f32.mrb[0].mxu0
    %v826 = vpop.f32.mrb[0].mxu0
    %v827 = vadd.f32 %v479, %v826
    %v828 = vpop.f32.mrb[0].mxu0
    %829 = vmatprep.mubr.bf16.mxu0 %v722
    %830 = vmatmul.mubr.bf16.gmra.mrb[0].mxu0 %v721
    %v831 = vpop.f32.mrb[0].mxu0
    %v832 = vadd.f32 %v484, %v831
    %v833 = vpop.f32.mrb[0].mxu0
    %v834 = vpop.f32.mrb[0].mxu0
    %v835 = vadd.f32 %v489, %v834
    %v836 = vpop.f32.mrb[0].mxu0
    %837 = vmatprep.mubr.bf16.mxu0 %v724
    %838 = vmatmul.mubr.bf16.gmra.mrb[0].mxu0 %v723
    %v839 = vpop.f32.mrb[0].mxu0
    %v840 = vadd.f32 %v494, %v839
    %v841 = vpop.f32.mrb[0].mxu0
    %v842 = vpop.f32.mrb[0].mxu0
    %v843 = vadd.f32 %v499, %v842
    %v844 = vpop.f32.mrb[0].mxu0
    %845 = vmatprep.mubr.bf16.mxu0 %v726
    %846 = vmatmul.mubr.bf16.gmra.mrb[0].mxu0 %v725
    %v847 = vpop.f32.mrb[0].mxu0
    %v848 = vadd.f32 %v504, %v847
    %v849 = vpop.f32.mrb[0].mxu0
    %v850 = vpop.f32.mrb[0].mxu0
    %v851 = vadd.f32 %v509, %v850
    %v852 = vpop.f32.mrb[0].mxu0
    %853 = vmatprep.mubr.bf16.mxu0 %v728
    %854 = vmatmul.mubr.bf16.gmra.mrb[0].mxu0 %v727
    %v855 = vpop.f32.mrb[0].mxu0
    %v856 = vadd.f32 %v514, %v855
    %v857 = vpop.f32.mrb[0].mxu0
    %v858 = vpop.f32.mrb[0].mxu0
    %v859 = vadd.f32 %v519, %v858
    %v860 = vpop.f32.mrb[0].mxu0
    %861 = vmatprep.mubr.bf16.mxu0 %v730
    %862 = vmatmul.mubr.bf16.gmra.mrb[0].mxu0 %v729
    %v863 = vpop.f32.mrb[0].mxu0
    %v864 = vadd.f32 %v524, %v863
    %v865 = vpop.f32.mrb[0].mxu0
    %v866 = vpop.f32.mrb[0].mxu0
    %v867 = vadd.f32 %v529, %v866
    %v868 = vpop.f32.mrb[0].mxu0
    %869 = vmatprep.mubr.bf16.mxu0 %v732
    %870 = vmatmul.mubr.bf16.gmra.mrb[0].mxu0 %v731
    %v871 = vpop.f32.mrb[0].mxu0
    %v872 = vadd.f32 %v534, %v871
    %v873 = vpop.f32.mrb[0].mxu0
    %v874 = vpop.f32.mrb[0].mxu0
    %v875 = vadd.f32 %v539, %v874
    %v876 = vpop.f32.mrb[0].mxu0
    %877 = vmatprep.mubr.bf16.mxu0 %v734
    %878 = vmatmul.mubr.bf16.gmra.mrb[0].mxu0 %v733
    %v879 = vpop.f32.mrb[0].mxu0
    %v880 = vadd.f32 %v544, %v879
    %v881 = vpop.f32.mrb[0].mxu0
    %v882 = vpop.f32.mrb[0].mxu0
    %v883 = vadd.f32 %v549, %v882
    %v884 = vpop.f32.mrb[0].mxu0
    %885 = vmatprep.mubr.bf16.mxu0 %v736
    %886 = vmatmul.mubr.bf16.gmra.mrb[0].mxu0 %v735
    %v887 = vpop.f32.mrb[0].mxu0
    %v888 = vadd.f32 %v554, %v887
    %v889 = vpop.f32.mrb[0].mxu0
    %v890 = vpop.f32.mrb[0].mxu0
    %v891 = vadd.f32 %v559, %v890
    %v892 = vpop.f32.mrb[0].mxu0
    %893 = vmatprep.mubr.bf16.mxu0 %v738
    %894 = vmatmul.mubr.bf16.gmra.mrb[0].mxu0 %v737
    %v895 = vpop.f32.mrb[0].mxu0
    %v896 = vadd.f32 %v564, %v895
    %v897 = vpop.f32.mrb[0].mxu0
    %v898 = vpop.f32.mrb[0].mxu0
    %v899 = vadd.f32 %v569, %v898
    %v900 = vpop.f32.mrb[0].mxu0
    %901 = vmatprep.mubr.bf16.mxu0 %v740
    %902 = vmatmul.mubr.bf16.gmra.mrb[0].mxu0 %v739
    %v903 = vpop.f32.mrb[0].mxu0
    %v904 = vadd.f32 %v574, %v903
    %v905 = vpop.f32.mrb[0].mxu0
    %v906 = vpop.f32.mrb[0].mxu0
    %v907 = vadd.f32 %v579, %v906
    %v908 = vpop.f32.mrb[0].mxu0
    %909 = vmatprep.mubr.bf16.mxu0 %v742
    %910 = vmatmul.mubr.bf16.gmra.mrb[0].mxu0 %v741
    %v911 = vpop.f32.mrb[0].mxu0
    %v912 = vadd.f32 %v584, %v911
    %v913 = vpop.f32.mrb[0].mxu0
    %v914 = vpop.f32.mrb[0].mxu0
    %v915 = vadd.f32 %v589, %v914
    %v916 = vpop.f32.mrb[0].mxu0
    %917 = vmatprep.mubr.bf16.mxu0 %v744
    %918 = vmatmul.mubr.bf16.gmra.mrb[0].mxu0 %v743
    %v919 = vpop.f32.mrb[0].mxu0
    %v920 = vadd.f32 %v594, %v919
    %v921 = vpop.f32.mrb[0].mxu0
    %v922 = vpop.f32.mrb[0].mxu0
    %v923 = vadd.f32 %v599, %v922
    %v924 = vpop.f32.mrb[0].mxu0
    %925 = vmatprep.mubr.bf16.mxu0 %v746
    %926 = vmatmul.mubr.bf16.gmra.mrb[0].mxu0 %v745
    %v927 = vpop.f32.mrb[0].mxu0
    %v928 = vadd.f32 %v604, %v927
    %v929 = vpop.f32.mrb[0].mxu0
    %v930 = vpop.f32.mrb[0].mxu0
    %v931 = vadd.f32 %v609, %v930
    %v932 = vpop.f32.mrb[0].mxu0
    %933 = vmatprep.mubr.bf16.mxu0 %v748
    %934 = vmatmul.mubr.bf16.gmra.mrb[0].mxu0 %v747
    %v935 = vpop.f32.mrb[0].mxu0
    %v936 = vadd.f32 %v614, %v935
    %v937 = vpop.f32.mrb[0].mxu0
    %v938 = vpop.f32.mrb[0].mxu0
    %v939 = vadd.f32 %v619, %v938
    %v940 = vpop.f32.mrb[0].mxu0
    %941 = vdwg.mxu0
    %v942 = vmax.f32 %v816, 0.0
    %v943 = vmax.f32 %v819, 0.0
    %v944 = vmax.f32 %v824, 0.0
    %v945 = vmax.f32 %v827, 0.0
    %v946 = vmax.f32 %v832, 0.0
    %v947 = vmax.f32 %v835, 0.0
    %v948 = vmax.f32 %v840, 0.0
    %v949 = vmax.f32 %v843, 0.0
    %v950 = vmax.f32 %v848, 0.0
    %v951 = vmax.f32 %v851, 0.0
    %v952 = vmax.f32 %v856, 0.0
    %v953 = vmax.f32 %v859, 0.0
    %v954 = vmax.f32 %v864, 0.0
    %v955 = vmax.f32 %v867, 0.0
    %v956 = vmax.f32 %v872, 0.0
    %v957 = vmax.f32 %v875, 0.0
    %v958 = vmax.f32 %v880, 0.0
    %v959 = vmax.f32 %v883, 0.0
    %v960 = vmax.f32 %v888, 0.0
    %v961 = vmax.f32 %v891, 0.0
    %v962 = vmax.f32 %v896, 0.0
    %v963 = vmax.f32 %v899, 0.0
    %v964 = vmax.f32 %v904, 0.0
    %v965 = vmax.f32 %v907, 0.0
    %v966 = vmax.f32 %v912, 0.0
    %v967 = vmax.f32 %v915, 0.0
    %v968 = vmax.f32 %v920, 0.0
    %v969 = vmax.f32 %v923, 0.0
    %v970 = vmax.f32 %v928, 0.0
    %v971 = vmax.f32 %v931, 0.0
    %v972 = vmax.f32 %v936, 0.0
    %v973 = vmax.f32 %v939, 0.0
    %v974 = vld [vmem:[%s4] sm:$0xff]
    %v975 = vld [vmem:[%s4 + $0x8] sm:$0xff]
    %976 = vmatprep.subr.mxu0 0.0
    %977 = vmatpush1.msra.mxu0 %v942
    %978 = vmatprep.subr.mxu0 0.0
    %979 = vmatpush1.msra.mxu0 %v943
    %980 = vmatprep.subr.mxu0 0.0
    %981 = vmatpush1.msra.mxu0 %v944
    %982 = vmatprep.subr.mxu0 0.0
    %983 = vmatpush1.msra.mxu0 %v945
    %984 = vmatprep.subr.mxu0 0.0
    %985 = vmatpush1.msra.mxu0 %v946
    %986 = vmatprep.subr.mxu0 0.0
    %987 = vmatpush1.msra.mxu0 %v947
    %988 = vmatprep.subr.mxu0 0.0
    %989 = vmatpush1.msra.mxu0 %v948
    %990 = vmatprep.subr.mxu0 0.0
    %991 = vmatpush1.msra.mxu0 %v949
    %992 = vmatprep.subr.mxu0 0.0
    %993 = vmatpush1.msra.mxu0 %v950
    %994 = vmatprep.subr.mxu0 0.0
    %995 = vmatpush1.msra.mxu0 %v951
    %996 = vmatprep.subr.mxu0 0.0
    %997 = vmatpush1.msra.mxu0 %v952
    %998 = vmatprep.subr.mxu0 0.0
    %999 = vmatpush1.msra.mxu0 %v953
    %1000 = vmatprep.subr.mxu0 0.0
    %1001 = vmatpush1.msra.mxu0 %v954
    %1002 = vmatprep.subr.mxu0 0.0
    %1003 = vmatpush1.msra.mxu0 %v955
    %1004 = vmatprep.subr.mxu0 0.0
    %1005 = vmatpush1.msra.mxu0 %v956
    %1006 = vmatprep.subr.mxu0 0.0
    %1007 = vmatpush1.msra.mxu0 %v957
    %1008 = vmatprep.subr.mxu0 0.0
    %1009 = vmatpush1.msra.mxu0 %v958
    %1010 = vmatprep.subr.mxu0 0.0
    %1011 = vmatpush1.msra.mxu0 %v959
    %1012 = vmatprep.subr.mxu0 0.0
    %1013 = vmatpush1.msra.mxu0 %v960
    %1014 = vmatprep.subr.mxu0 0.0
    %1015 = vmatpush1.msra.mxu0 %v961
    %1016 = vmatprep.subr.mxu0 0.0
    %1017 = vmatpush1.msra.mxu0 %v962
    %1018 = vmatprep.subr.mxu0 0.0
    %1019 = vmatpush1.msra.mxu0 %v963
    %1020 = vmatprep.subr.mxu0 0.0
    %1021 = vmatpush1.msra.mxu0 %v964
    %1022 = vmatprep.subr.mxu0 0.0
    %1023 = vmatpush1.msra.mxu0 %v965
    %1024 = vmatprep.subr.mxu0 0.0
    %1025 = vmatpush1.msra.mxu0 %v966
    %1026 = vmatprep.subr.mxu0 0.0
    %1027 = vmatpush1.msra.mxu0 %v967
    %1028 = vmatprep.subr.mxu0 0.0
    %1029 = vmatpush1.msra.mxu0 %v968
    %1030 = vmatprep.subr.mxu0 0.0
    %1031 = vmatpush1.msra.mxu0 %v969
    %1032 = vmatprep.subr.mxu0 0.0
    %1033 = vmatpush1.msra.mxu0 %v970
    %1034 = vmatprep.subr.mxu0 0.0
    %1035 = vmatpush1.msra.mxu0 %v971
    %1036 = vmatprep.subr.mxu0 0.0
    %1037 = vmatpush1.msra.mxu0 %v972
    %1038 = vmatprep.subr.mxu0 0.0
    %1039 = vmatpush1.msra.mxu0 %v973
    %1040 = vmatprep.mubr.f32.mxu0 %v975
    %1041 = vmatmul.mubr.f32.gmra.mrb[0].mxu0 %v974
    %v1042 = vpop.f32.mrb[0].mxu0
    %v1043 = vadd.f32 0.0, %v1042
    %v1044 = vpop.f32.mrb[0].mxu0
    %1045 = vdwg.mxu0
    %1046 = vst [vmem:[#allocation2] sm:$0xff] %v1043
    // Predicated region
    $region22: #{tpu_custom_call.1} parent=1 // pred_check
      _
    $region23: #{tpu_custom_call.1} parent=1 // pred_check_branch
      %1048 = sbr.rel (0) target = $region25
    $region24: #{tpu_custom_call.1} parent=1 // pred_region
      %s1050 = ssub.s32 128, 128
      %1051 = vsyncadd [#allocation3], %s1050
      %s1053 = sshll.u32 [#allocation2], 4
      %s1054 = int_to_ptr.vmem [resolvable:$true] %s1053
      %1056 = dma.vmem_to_hbm [thread:$0]  %s1054, 128, %s5, [#allocation3]
    $region25: #{tpu_custom_call.1} parent=1 // pred_fallthru
      _
    // Predicated region
    $region26: #{tpu_custom_call.1} parent=1 // pred_check
      _
    $region27: #{tpu_custom_call.1} parent=1 // pred_check_branch
      %1058 = sbr.rel (0) target = $region29
    $region28: #{tpu_custom_call.1} parent=1 // pred_region
      %1059 = dma.done [#allocation3], 128
    $region29: #{tpu_custom_call.1} parent=1 // pred_fallthru
      _
    %1060 = vsyncpa [#allocation3], 1

</llo_original>
